<compile_context>
chip_gen: v7x
topology: tpu7x:2x2x1
jax: 0.10.0
libtpu: 0.0.40
codegen_flags: <defaults>
</compile_context>

<pallas_src>
import functools

import jax
import jax.numpy as jnp
from jax import lax
from jax.experimental import pallas as pl
from jax.experimental.pallas import tpu as pltpu

_LANE = 128
_SUBLANE = 8
_GROUP = _LANE * _SUBLANE  # 1024 elements = one f32 vreg


def _dice_partial_kernel(pred_ref, targ_ref, out_ref, *, rows_total, rows_per_chunk):
    """Accumulate vreg-wide partial sums for one batch row.

    pred_ref/targ_ref: (1, rows_per_chunk, 128) blocks (native dtype).
    out_ref:           (1, 24, 128) f32, resident across the chunk axis.
      rows  0: 8  -> partial sum(pred * target)
      rows  8:16 -> partial sum(pred)
      rows 16:24 -> partial sum(target)
    """
    c = pl.program_id(1)

    @pl.when(c == 0)
    def _():
        out_ref[...] = jnp.zeros_like(out_ref)

    p = pred_ref[0].astype(jnp.float32)   # (rows_per_chunk, 128)
    g = targ_ref[0].astype(jnp.float32)

    # Only emitted when the chunk grid does not evenly cover R: zero out rows
    # past the end of this example (sum-neutral), guarding against whatever
    # the boundary block read contains.
    if rows_total % rows_per_chunk != 0:
        row = c * rows_per_chunk + lax.broadcasted_iota(jnp.int32, p.shape, 0)
        valid = row < rows_total
        p = jnp.where(valid, p, 0.0)
        g = jnp.where(valid, g, 0.0)

    n_vregs = rows_per_chunk // _SUBLANE

    def vreg_sum(x):
        # (rows, 128) -> (rows/8, 8, 128): layout-preserving split into whole
        # vregs; summing axis 0 is pure elementwise VPU adds (no XLU).
        return jnp.sum(x.reshape(n_vregs, _SUBLANE, _LANE), axis=0)

    # Full-vreg, unmasked read-modify-write of the VMEM-resident accumulator.
    out_ref[0, 0:_SUBLANE, :] += vreg_sum(p * g)
    out_ref[0, _SUBLANE:2 * _SUBLANE, :] += vreg_sum(p)
    out_ref[0, 2 * _SUBLANE:3 * _SUBLANE, :] += vreg_sum(g)


def dice_loss_pallas(pred, target, *, rows_per_chunk=2048):
    """pred, target: (B, C, H, W) arrays (any float dtype). Returns f32 scalar."""
    B = pred.shape[0]
    p = pred.reshape(B, -1)       # native dtype, no upcast here
    g = target.reshape(B, -1)
    N = p.shape[1]

    # Lane+sublane-dense layout (B, R, 128) with R a multiple of 8.  A copy
    # (pad) only happens in the uncommon ragged case; zeros are sum-neutral.
    n_pad = pl.cdiv(N, _GROUP) * _GROUP
    if n_pad != N:
        p = jnp.pad(p, ((0, 0), (0, n_pad - N)))
        g = jnp.pad(g, ((0, 0), (0, n_pad - N)))
    R = n_pad // _LANE            # multiple of 8
    p = p.reshape(B, R, _LANE)
    g = g.reshape(B, R, _LANE)

    if R <= rows_per_chunk:
        rows_per_chunk = R        # single full-extent chunk per example
        n_chunks = 1
    else:
        rows_per_chunk = max(_SUBLANE, (rows_per_chunk // _SUBLANE) * _SUBLANE)
        n_chunks = pl.cdiv(R, rows_per_chunk)

    kernel = functools.partial(
        _dice_partial_kernel, rows_total=R, rows_per_chunk=rows_per_chunk)

    partial = pl.pallas_call(
        kernel,
        out_shape=jax.ShapeDtypeStruct((B, 3 * _SUBLANE, _LANE), jnp.float32),
        grid=(B, n_chunks),
        in_specs=[
            pl.BlockSpec((1, rows_per_chunk, _LANE), lambda b, c: (b, c, 0)),
            pl.BlockSpec((1, rows_per_chunk, _LANE), lambda b, c: (b, c, 0)),
        ],
        out_specs=pl.BlockSpec((1, 3 * _SUBLANE, _LANE), lambda b, c: (b, 0, 0)),
        compiler_params=pltpu.CompilerParams(
            dimension_semantics=("parallel", "arbitrary")),
    )(p, g)

    # Tiny finalize in plain JAX: reduce each (8, 128) partial and apply the
    # dice formula on 3*B scalars.
    part = partial.reshape(B, 3, _SUBLANE, _LANE)
    inter = jnp.sum(part[:, 0], axis=(-1, -2))
    psum = jnp.sum(part[:, 1], axis=(-1, -2))
    tsum = jnp.sum(part[:, 2], axis=(-1, -2))
    smooth = jnp.float32(1.0)
    score = (2.0 * inter + smooth) / (psum + tsum + smooth)
    return jnp.float32(1.0) - jnp.sum(score) / jnp.float32(B)


def dice_loss_ref(pred, target):
    smooth = 1.0
    B = pred.shape[0]
    p = pred.reshape(B, -1).astype(jnp.float32)
    g = target.reshape(B, -1).astype(jnp.float32)
    inter = jnp.sum(p * g, axis=1)
    score = (2.0 * inter + smooth) / (jnp.sum(p, axis=1) + jnp.sum(g, axis=1) + smooth)
    return 1.0 - jnp.sum(score) / B


if __name__ == "__main__":
    key = jax.random.PRNGKey(0)
    k1, k2 = jax.random.split(key)
    B, C, H, W = 2, 4, 16, 16
    pred = jax.nn.sigmoid(jax.random.normal(k1, (B, C, H, W), dtype=jnp.float32))
    target = (jax.random.uniform(k2, (B, C, H, W)) > 0.5).astype(jnp.float32)

    loss = dice_loss_pallas(pred, target)
    loss = jax.block_until_ready(loss)

    ref = dice_loss_ref(pred, target)
    assert jnp.allclose(loss, ref, atol=1e-5, rtol=1e-5), (loss, ref)
    print("KERNEL_OK")
</pallas_src>

<mosaic_0001>
module attributes {stable_mosaic.version = 11 : i64} {
  func.func @_dice_partial_kernel(%arg0: i32, %arg1: i32, %arg2: memref<1x8x128xf32, #tpu.memory_space<vmem>>, %arg3: memref<1x8x128xf32, #tpu.memory_space<vmem>>, %arg4: memref<1x24x128xf32, #tpu.memory_space<vmem>>) attributes {dimension_semantics = [#tpu.dimension_semantics<parallel>, #tpu.dimension_semantics<arbitrary>], iteration_bounds = array<i64: 2, 1>, scalar_prefetch = 0 : i64, scratch_operands = 0 : i64, tpu.core_type = #tpu.core_type<tc>, window_params = [{transform_indices = @transform_0, window_bounds = array<i64: 1, 8, 128>}, {transform_indices = @transform_1, window_bounds = array<i64: 1, 8, 128>}, {transform_indices = @transform_2, window_bounds = array<i64: 1, 24, 128>}]} {
    %c0_i32 = arith.constant 0 : i32
    %0 = arith.cmpi eq, %arg1, %c0_i32 : i32
    %1 = arith.extui %0 : i1 to i32
    %c0_i32_0 = arith.constant 0 : i32
    %2 = arith.cmpi ne, %1, %c0_i32_0 : i32
    scf.if %2 {
      %cst_24 = arith.constant 0.000000e+00 : f32
      %32 = vector.broadcast %cst_24 : f32 to vector<1x24x128xf32>
      %c0_25 = arith.constant 0 : index
      %c0_26 = arith.constant 0 : index
      %c0_27 = arith.constant 0 : index
      %33 = vector.load %arg4[%c0_25, %c0_26, %c0_27] : memref<1x24x128xf32, #tpu.memory_space<vmem>>, vector<1x24x128xf32>
      tpu.vector_store %arg4[%c0_25, %c0_26, %c0_27], %32 {strides = array<i32>} : memref<1x24x128xf32, #tpu.memory_space<vmem>>, vector<1x24x128xf32>,
    } else {
    }
    %c0 = arith.constant 0 : index
    %c0_1 = arith.constant 0 : index
    %c0_2 = arith.constant 0 : index
    %3 = vector.load %arg2[%c0, %c0_1, %c0_2] : memref<1x8x128xf32, #tpu.memory_space<vmem>>, vector<1x8x128xf32>
    %4 = vector.shape_cast %3 : vector<1x8x128xf32> to vector<8x128xf32>
    %c0_3 = arith.constant 0 : index
    %c0_4 = arith.constant 0 : index
    %c0_5 = arith.constant 0 : index
    %5 = vector.load %arg3[%c0_3, %c0_4, %c0_5] : memref<1x8x128xf32, #tpu.memory_space<vmem>>, vector<1x8x128xf32>
    %6 = vector.shape_cast %5 : vector<1x8x128xf32> to vector<8x128xf32>
    %c0_6 = arith.constant 0 : index
    %c0_7 = arith.constant 0 : index
    %c0_8 = arith.constant 0 : index
    %7 = vector.load %arg4[%c0_6, %c0_7, %c0_8] : memref<1x24x128xf32, #tpu.memory_space<vmem>>, vector<1x8x128xf32>
    %8 = vector.shape_cast %7 : vector<1x8x128xf32> to vector<8x128xf32>
    %9 = arith.mulf %4, %6 : vector<8x128xf32>
    %10 = vector.shape_cast %9 : vector<8x128xf32> to vector<1x8x128xf32>
    %cst = arith.constant dense<0.000000e+00> : vector<8x128xf32>
    %11 = vector.multi_reduction <add>, %10, %cst [0] : vector<1x8x128xf32> to vector<8x128xf32>
    %12 = arith.addf %8, %11 : vector<8x128xf32>
    %c0_9 = arith.constant 0 : index
    %c0_10 = arith.constant 0 : index
    %c0_11 = arith.constant 0 : index
    %13 = vector.load %arg4[%c0_9, %c0_10, %c0_11] : memref<1x24x128xf32, #tpu.memory_space<vmem>>, vector<1x8x128xf32>
    %14 = vector.shape_cast %13 : vector<1x8x128xf32> to vector<8x128xf32>
    %15 = vector.shape_cast %12 : vector<8x128xf32> to vector<1x8x128xf32>
    tpu.vector_store %arg4[%c0_9, %c0_10, %c0_11], %15 {strides = array<i32>} : memref<1x24x128xf32, #tpu.memory_space<vmem>>, vector<1x8x128xf32>,
    %c0_12 = arith.constant 0 : index
    %c8 = arith.constant 8 : index
    %c0_13 = arith.constant 0 : index
    %16 = vector.load %arg4[%c0_12, %c8, %c0_13] : memref<1x24x128xf32, #tpu.memory_space<vmem>>, vector<1x8x128xf32>
    %17 = vector.shape_cast %16 : vector<1x8x128xf32> to vector<8x128xf32>
    %18 = vector.shape_cast %4 : vector<8x128xf32> to vector<1x8x128xf32>
    %cst_14 = arith.constant dense<0.000000e+00> : vector<8x128xf32>
    %19 = vector.multi_reduction <add>, %18, %cst_14 [0] : vector<1x8x128xf32> to vector<8x128xf32>
    %20 = arith.addf %17, %19 : vector<8x128xf32>
    %c0_15 = arith.constant 0 : index
    %c8_16 = arith.constant 8 : index
    %c0_17 = arith.constant 0 : index
    %21 = vector.load %arg4[%c0_15, %c8_16, %c0_17] : memref<1x24x128xf32, #tpu.memory_space<vmem>>, vector<1x8x128xf32>
    %22 = vector.shape_cast %21 : vector<1x8x128xf32> to vector<8x128xf32>
    %23 = vector.shape_cast %20 : vector<8x128xf32> to vector<1x8x128xf32>
    tpu.vector_store %arg4[%c0_15, %c8_16, %c0_17], %23 {strides = array<i32>} : memref<1x24x128xf32, #tpu.memory_space<vmem>>, vector<1x8x128xf32>,
    %c0_18 = arith.constant 0 : index
    %c16 = arith.constant 16 : index
    %c0_19 = arith.constant 0 : index
    %24 = vector.load %arg4[%c0_18, %c16, %c0_19] : memref<1x24x128xf32, #tpu.memory_space<vmem>>, vector<1x8x128xf32>
    %25 = vector.shape_cast %24 : vector<1x8x128xf32> to vector<8x128xf32>
    %26 = vector.shape_cast %6 : vector<8x128xf32> to vector<1x8x128xf32>
    %cst_20 = arith.constant dense<0.000000e+00> : vector<8x128xf32>
    %27 = vector.multi_reduction <add>, %26, %cst_20 [0] : vector<1x8x128xf32> to vector<8x128xf32>
    %28 = arith.addf %25, %27 : vector<8x128xf32>
    %c0_21 = arith.constant 0 : index
    %c16_22 = arith.constant 16 : index
    %c0_23 = arith.constant 0 : index
    %29 = vector.load %arg4[%c0_21, %c16_22, %c0_23] : memref<1x24x128xf32, #tpu.memory_space<vmem>>, vector<1x8x128xf32>
    %30 = vector.shape_cast %29 : vector<1x8x128xf32> to vector<8x128xf32>
    %31 = vector.shape_cast %28 : vector<8x128xf32> to vector<1x8x128xf32>
    tpu.vector_store %arg4[%c0_21, %c16_22, %c0_23], %31 {strides = array<i32>} : memref<1x24x128xf32, #tpu.memory_space<vmem>>, vector<1x8x128xf32>,
    return
  }
  func.func @transform_0(%arg0: i32, %arg1: i32) -> (i32, i32, i32) {
    %c0_i32 = arith.constant 0 : i32
    %c0_i32_0 = arith.constant 0 : i32
    return %arg0, %arg1, %c0_i32 : i32, i32, i32
  }
  func.func @transform_1(%arg0: i32, %arg1: i32) -> (i32, i32, i32) {
    %c0_i32 = arith.constant 0 : i32
    %c0_i32_0 = arith.constant 0 : i32
    return %arg0, %arg1, %c0_i32 : i32, i32, i32
  }
  func.func @transform_2(%arg0: i32, %arg1: i32) -> (i32, i32, i32) {
    %c0_i32 = arith.constant 0 : i32
    %c0_i32_0 = arith.constant 0 : i32
    %c0_i32_1 = arith.constant 0 : i32
    return %arg0, %c0_i32, %c0_i32_0 : i32, i32, i32
  }
}

</mosaic_0001>

<llo_original>
// kernel: tpu_custom_call.1
$region0: #{tpu_custom_call.1}
  #allocation0 [shape = 'u32[]', space=smem, size = 0x4, offset = 0x4, fixed_abs, tag = 'smem constant byte address 0x4 - core index']
  #allocation1 [shape = 'u32[144,128]{1,0:T(1,128)}', space=vmem, size = 0x12000, scoped, tag = 'internal scratch']
  %s0 = inlined_call_operand.hbm [shape: f32[2,8,128], index: 0, kind: input, shape index: {}]
  %s1 = inlined_call_operand.hbm [shape: f32[2,8,128], index: 1, kind: input, shape index: {}]
  %s2 = inlined_call_operand.hbm [shape: f32[2,24,128], index: 2, kind: output, shape index: {}]
  %s3 = sld [smem:[#allocation0]]
  $region53: #{tpu_custom_call.1} parent=0
    _
  %s5 = ssub.s32 1, %s3
  %s6 = scalar_select 0, %s5, %s3
  $region1: #{tpu_custom_call.1} parent=0
    #allocation2 [shape = 'u8[8192]{0}', space=vmem, size = 0x2000, scoped, tag = 'input window, operand 0']
    #allocation3 [shape = 's32[2]{0}', space=sflag, size = 0x8, scoped, tag = 'scoped memory for tpu_custom_call.1']
    #allocation4 [shape = 's32[2]{0}', space=sflag, size = 0x8, scoped, tag = 'scoped memory for tpu_custom_call.1']
    #allocation5 [shape = 'u8[8192]{0}', space=vmem, size = 0x2000, scoped, tag = 'input window, operand 1']
    #allocation6 [shape = 's32[2]{0}', space=sflag, size = 0x8, scoped, tag = 'scoped memory for tpu_custom_call.1']
    #allocation7 [shape = 'u8[24576]{0}', space=vmem, size = 0x6000, scoped, tag = 'output window, operand 0']
    %7 = vsyncpa [#allocation3], 0
    %s8 = scalar_lea.sflag [#allocation3], 1
    %9 = vsyncpa %s8, 0
    %10 = vsyncpa [#allocation6], 0
    %s11 = scalar_lea.sflag [#allocation6], 1
    %12 = vsyncpa %s11, 0
    %13 = vsyncpa [#allocation4], 0
    %s14 = scalar_lea.sflag [#allocation4], 1
    %15 = vsyncpa %s14, 0
    loop: start=0, step=1, limit=4
    $region2: #{tpu_custom_call.1} parent=1 // loop_pre_header
      _
    $region3: #{tpu_custom_call.1} parent=1 // loop_header
      %s17 = sphi 0, %s21
      %p18 = scmp.ge.s32.totalorder %s17, 4
      %s24 = sphi 0, %s36
      %s25 = sphi 0, %s32
      %s26 = sphi 0, %s24
      %s27 = sphi 0, %s25
      %s28 = sphi 0, %s26
      %s29 = sphi 0, %s27
      %s41 = sphi 0, %s43
      %s44 = sphi 0, %s41
      %s45 = sphi 0, %s44
      %s61 = sphi 0, %s45
      %s69 = sphi 0, %s71
      %s72 = sphi 0, %s69
      %s73 = sphi 0, %s72
      %s89 = sphi 0, %s73
      %s95 = sphi 0, %s97
      %s98 = sphi 0, %s95
      %s99 = sphi 0, %s98
      %s115 = sphi 0, %s99
    $region4: #{tpu_custom_call.1} parent=1 // loop_header_branch
      %20 = sbr.rel (%p18) target = $region8
    $region5: #{tpu_custom_call.1} parent=1 // loop_body
      %s22 = ssub.s32 %s17, 1
      %s23 = ssub.s32 %s17, 2
      %s30 = sadd.s32 1, %s25
      %p31 = scmp.ge.s32.totalorder %s30, 1
      %s32 = scalar_select %p31, 0, %s30
      %s33 = sadd.s32 1, %s24
      %s34 = scalar_select %p31, %s33, %s24
      %p35 = scmp.ge.s32.totalorder %s34, 2
      %s36 = scalar_select %p35, 0, %s34
      %s37 = ssub.s32 %s24, %s36
      %s38 = ssub.s32 %s25, %s32
      %s39 = sor.u32 %s37, %s38
      %p40 = scmp.eq.s32.totalorder %s39, 0
      %s42 = sadd.s32 %s41, 1
      %s43 = scalar_select %p40, %s41, %s42
      %p46 = pneg %p40
      %p47 = scmp.eq.s32.totalorder %s17, 1
      %p48 = por %p46, %p47
      %p49 = scmp.ne.s32.totalorder %s41, %s44
      %p50 = scmp.eq.s32.totalorder %s17, 0
      %p51 = por %p49, %p50
      %p52 = scmp.ne.s32.totalorder %s41, %s44
      %p53 = scmp.eq.s32.totalorder %s22, 1
      %p54 = por %p52, %p53
      %p55 = scmp.ne.s32.totalorder %s44, %s45
      %p56 = scmp.eq.s32.totalorder %s22, 0
      %p57 = por %p55, %p56
      %p58 = scmp.ne.s32.totalorder %s44, %s45
      %p59 = scmp.eq.s32.totalorder %s23, 1
      %p60 = por %p58, %p59
      %p62 = scmp.ne.s32.totalorder %s45, %s61
      %p63 = scmp.eq.s32.totalorder %s23, 0
      %p64 = por %p62, %p63
      %s65 = ssub.s32 %s24, %s36
      %s66 = ssub.s32 %s25, %s32
      %s67 = sor.u32 %s65, %s66
      %p68 = scmp.eq.s32.totalorder %s67, 0
      %s70 = sadd.s32 %s69, 1
      %s71 = scalar_select %p68, %s69, %s70
      %p74 = pneg %p68
      %p75 = scmp.eq.s32.totalorder %s17, 1
      %p76 = por %p74, %p75
      %p77 = scmp.ne.s32.totalorder %s69, %s72
      %p78 = scmp.eq.s32.totalorder %s17, 0
      %p79 = por %p77, %p78
      %p80 = scmp.ne.s32.totalorder %s69, %s72
      %p81 = scmp.eq.s32.totalorder %s22, 1
      %p82 = por %p80, %p81
      %p83 = scmp.ne.s32.totalorder %s72, %s73
      %p84 = scmp.eq.s32.totalorder %s22, 0
      %p85 = por %p83, %p84
      %p86 = scmp.ne.s32.totalorder %s72, %s73
      %p87 = scmp.eq.s32.totalorder %s23, 1
      %p88 = por %p86, %p87
      %p90 = scmp.ne.s32.totalorder %s73, %s89
      %p91 = scmp.eq.s32.totalorder %s23, 0
      %p92 = por %p90, %p91
      %s93 = ssub.s32 %s24, %s36
      %p94 = scmp.eq.s32.totalorder %s93, 0
      %s96 = sadd.s32 %s95, 1
      %s97 = scalar_select %p94, %s95, %s96
      %p100 = pneg %p94
      %p101 = scmp.eq.s32.totalorder %s17, 1
      %p102 = por %p100, %p101
      %p103 = scmp.ne.s32.totalorder %s95, %s98
      %p104 = scmp.eq.s32.totalorder %s17, 0
      %p105 = por %p103, %p104
      %p106 = scmp.ne.s32.totalorder %s95, %s98
      %p107 = scmp.eq.s32.totalorder %s22, 1
      %p108 = por %p106, %p107
      %p109 = scmp.ne.s32.totalorder %s98, %s99
      %p110 = scmp.eq.s32.totalorder %s22, 0
      %p111 = por %p109, %p110
      %p112 = scmp.ne.s32.totalorder %s98, %s99
      %p113 = scmp.eq.s32.totalorder %s23, 1
      %p114 = por %p112, %p113
      %p116 = scmp.ne.s32.totalorder %s99, %s115
      %p117 = scmp.eq.s32.totalorder %s23, 0
      %p118 = por %p116, %p117
      %p119 = scmp.le.s32.totalorder 1, %s17
      %p120 = scmp.lt.s32.totalorder %s17, 3
      %p121 = pnand %p119, %p120
      %p122 = pneg %p121
      // Predicated region
      $region9: #{tpu_custom_call.1} parent=5 // pred_check
        _
      $region10: #{tpu_custom_call.1} parent=5 // pred_check_branch
        %124 = sbr.rel (%p121) target = $region12
      $region11: #{tpu_custom_call.1} parent=5 // pred_region
        %s125 = ssub.s32 %s17, 1
      $region12: #{tpu_custom_call.1} parent=5 // pred_fallthru
        _
      %p126 = scmp.lt.s32.totalorder %s17, 2
      // Predicated region
      $region13: #{tpu_custom_call.1} parent=5 // pred_check
        %p127 = pneg %p126
      $region14: #{tpu_custom_call.1} parent=5 // pred_check_branch
        %129 = sbr.rel (%p127) target = $region16
      $region15: #{tpu_custom_call.1} parent=5 // pred_region
        // Predicated region
        $region17: #{tpu_custom_call.1} parent=15 // pred_check
          %p130 = pneg %p51
        $region18: #{tpu_custom_call.1} parent=15 // pred_check_branch
          %132 = sbr.rel (%p130) target = $region20
        $region19: #{tpu_custom_call.1} parent=15 // pred_region
          %s133 = sand.u32 %s41, 1
          %s134 = scalar_lea.sflag [#allocation3], %s133
          %s135 = sand.u32 %s41, 1
          %s136 = smul.addr %s135, 8
          %s137 = scalar_lea.vmem [#allocation2], %s136
          %s139 = ssub.s32 128, 128
          %140 = vsyncadd %s134, %s139
          %s141 = sadd.s32 %s25, %s24
          %s142 = smul.addr %s141, 128
          %s143 = scalar_lea.hbm %s0, %s142
          %s145 = sshll.u32 %s137, 4
          %s146 = int_to_ptr.vmem [resolvable:$true] %s145
          %148 = dma.hbm_to_vmem [thread:$0]  %s143, 128, %s146, %s134
        $region20: #{tpu_custom_call.1} parent=15 // pred_fallthru
          _
        // Predicated region
        $region21: #{tpu_custom_call.1} parent=15 // pred_check
          %p149 = pneg %p79
        $region22: #{tpu_custom_call.1} parent=15 // pred_check_branch
          %151 = sbr.rel (%p149) target = $region24
        $region23: #{tpu_custom_call.1} parent=15 // pred_region
          %s152 = sand.u32 %s69, 1
          %s153 = scalar_lea.sflag [#allocation6], %s152
          %s154 = sand.u32 %s69, 1
          %s155 = smul.addr %s154, 8
          %s156 = scalar_lea.vmem [#allocation5], %s155
          %s158 = ssub.s32 128, 128
          %159 = vsyncadd %s153, %s158
          %s160 = sadd.s32 %s25, %s24
          %s161 = smul.addr %s160, 128
          %s162 = scalar_lea.hbm %s1, %s161
          %s164 = sshll.u32 %s156, 4
          %s165 = int_to_ptr.vmem [resolvable:$true] %s164
          %167 = dma.hbm_to_vmem [thread:$0]  %s162, 128, %s165, %s153
        $region24: #{tpu_custom_call.1} parent=15 // pred_fallthru
          _
      $region16: #{tpu_custom_call.1} parent=5 // pred_fallthru
        _
      %p168 = scmp.le.s32.totalorder 1, %s17
      %p169 = scmp.lt.s32.totalorder %s17, 3
      %p170 = pnand %p168, %p169
      %p171 = pneg %p170
      // Predicated region
      $region25: #{tpu_custom_call.1} parent=5 // pred_check
        _
      $region26: #{tpu_custom_call.1} parent=5 // pred_check_branch
        %173 = sbr.rel (%p170) target = $region28
      $region27: #{tpu_custom_call.1} parent=5 // pred_region
        %s174 = ssub.s32 %s17, 1
        %s175 = sand.u32 %s44, 1
        %s176 = scalar_lea.sflag [#allocation3], %s175
        %s177 = sand.u32 %s44, 1
        %s178 = smul.addr %s177, 8
        %s179 = scalar_lea.vmem [#allocation2], %s178
        // Predicated region
        $region29: #{tpu_custom_call.1} parent=27 // pred_check
          %p180 = pneg %p57
        $region30: #{tpu_custom_call.1} parent=27 // pred_check_branch
          %182 = sbr.rel (%p180) target = $region32
        $region31: #{tpu_custom_call.1} parent=27 // pred_region
          %183 = dma.done %s176, 128
        $region32: #{tpu_custom_call.1} parent=27 // pred_fallthru
          _
        %s184 = sand.u32 %s72, 1
        %s185 = scalar_lea.sflag [#allocation6], %s184
        %s186 = sand.u32 %s72, 1
        %s187 = smul.addr %s186, 8
        %s188 = scalar_lea.vmem [#allocation5], %s187
        // Predicated region
        $region33: #{tpu_custom_call.1} parent=27 // pred_check
          %p189 = pneg %p85
        $region34: #{tpu_custom_call.1} parent=27 // pred_check_branch
          %191 = sbr.rel (%p189) target = $region36
        $region35: #{tpu_custom_call.1} parent=27 // pred_region
          %192 = dma.done %s185, 128
        $region36: #{tpu_custom_call.1} parent=27 // pred_fallthru
          _
        %s193 = sand.u32 %s44, 1
        %s194 = scalar_lea.sflag [#allocation3], %s193
        %s195 = sand.u32 %s44, 1
        %s196 = smul.addr %s195, 8
        %s197 = scalar_lea.vmem [#allocation2], %s196
        %p198 = pneg %p57
        %p199 = pneg %p54
        %s200 = sand.u32 %s72, 1
        %s201 = scalar_lea.sflag [#allocation6], %s200
        %s202 = sand.u32 %s72, 1
        %s203 = smul.addr %s202, 8
        %s204 = scalar_lea.vmem [#allocation5], %s203
        %p205 = pneg %p85
        %p206 = pneg %p82
        %p207 = pneg %p111
        %p208 = pneg %p108
        %s209 = sand.u32 %s98, 1
        %s210 = scalar_lea.sflag [#allocation4], %s209
        %s211 = sand.u32 %s98, 1
        %s212 = smul.addr %s211, 24
        %s213 = scalar_lea.vmem [#allocation7], %s212
        %p214 = scmp.eq.s32.totalorder %s27, 0
        // Predicated region
        $region37: #{tpu_custom_call.1} parent=27 // pred_check
          %p215 = pneg %p214
        $region38: #{tpu_custom_call.1} parent=27 // pred_check_branch
          %217 = sbr.rel (%p215) target = $region40
        $region39: #{tpu_custom_call.1} parent=27 // pred_region
          %218 = vst [vmem:[%s213] sm:$0xff] 0.0
          %219 = vst [vmem:[%s213 + $0x8] sm:$0xff] 0.0
          %220 = vst [vmem:[%s213 + $0x10] sm:$0xff] 0.0
        $region40: #{tpu_custom_call.1} parent=27 // pred_fallthru
          _
        %v221 = vld [vmem:[%s179] sm:$0xff]
        %v222 = vld [vmem:[%s188] sm:$0xff]
        %v223 = vld [vmem:[%s213] sm:$0xff]
        %v224 = vmul.f32 %v221, %v222
        %v225 = vadd.f32 %v224, 0.0
        %v226 = vadd.f32 %v223, %v225
        %227 = vst [vmem:[%s213] sm:$0xff] %v226
        %v228 = vld [vmem:[%s213 + $0x8] sm:$0xff]
        %v229 = vadd.f32 %v221, 0.0
        %v230 = vadd.f32 %v228, %v229
        %231 = vst [vmem:[%s213 + $0x8] sm:$0xff] %v230
        %v232 = vld [vmem:[%s213 + $0x10] sm:$0xff]
        %v233 = vadd.f32 %v222, 0.0
        %v234 = vadd.f32 %v232, %v233
        %235 = vst [vmem:[%s213 + $0x10] sm:$0xff] %v234
        %s236 = sand.u32 %s98, 1
        %s237 = scalar_lea.sflag [#allocation4], %s236
        %s238 = sand.u32 %s98, 1
        %s239 = smul.addr %s238, 24
        %s240 = scalar_lea.vmem [#allocation7], %s239
        // Predicated region
        $region41: #{tpu_custom_call.1} parent=27 // pred_check
          %p241 = pneg %p108
        $region42: #{tpu_custom_call.1} parent=27 // pred_check_branch
          %243 = sbr.rel (%p241) target = $region44
        $region43: #{tpu_custom_call.1} parent=27 // pred_region
          %s245 = ssub.s32 384, 384
          %246 = vsyncadd %s237, %s245
          %s247 = smul.addr %s26, 3
          %s248 = smul.addr %s247, 128
          %s249 = scalar_lea.hbm %s2, %s248
          %s250 = sshll.u32 %s240, 4
          %s251 = int_to_ptr.vmem [resolvable:$true] %s250
          %256 = dma.vmem_to_hbm [thread:$0]  %s251, 384, %s249, %s237, 128, 128, 8
        $region44: #{tpu_custom_call.1} parent=27 // pred_fallthru
          _
      $region28: #{tpu_custom_call.1} parent=5 // pred_fallthru
        _
      %p257 = scmp.le.s32.totalorder 2, %s17
      // Predicated region
      $region45: #{tpu_custom_call.1} parent=5 // pred_check
        %p258 = pneg %p257
      $region46: #{tpu_custom_call.1} parent=5 // pred_check_branch
        %260 = sbr.rel (%p258) target = $region48
      $region47: #{tpu_custom_call.1} parent=5 // pred_region
        %s261 = ssub.s32 %s17, 2
        // Predicated region
        $region49: #{tpu_custom_call.1} parent=47 // pred_check
          %p262 = pneg %p114
        $region50: #{tpu_custom_call.1} parent=47 // pred_check_branch
          %264 = sbr.rel (%p262) target = $region52
        $region51: #{tpu_custom_call.1} parent=47 // pred_region
          %s265 = sand.u32 %s99, 1
          %s266 = scalar_lea.sflag [#allocation4], %s265
          %s267 = sand.u32 %s99, 1
          %s268 = smul.addr %s267, 24
          %s269 = scalar_lea.vmem [#allocation7], %s268
          %270 = dma.done %s266, 384
        $region52: #{tpu_custom_call.1} parent=47 // pred_fallthru
          _
      $region48: #{tpu_custom_call.1} parent=5 // pred_fallthru
        _
    $region6: #{tpu_custom_call.1} parent=1 // loop_footer
      %s21 = sadd.s32 1, %s17
    $region7: #{tpu_custom_call.1} parent=1 // loop_footer_branch
      %16 = sbr.rel target = $region3
    $region8: #{tpu_custom_call.1} parent=1 // loop_exit
      _
    %271 = vsyncpa [#allocation3], 1
    %s272 = scalar_lea.sflag [#allocation3], 1
    %273 = vsyncpa %s272, 1
    %274 = vsyncpa [#allocation6], 1
    %s275 = scalar_lea.sflag [#allocation6], 1
    %276 = vsyncpa %s275, 1
    %277 = vsyncpa [#allocation4], 1
    %s278 = scalar_lea.sflag [#allocation4], 1
    %279 = vsyncpa %s278, 1

</llo_original>
